<compile_context>
chip_gen: v7x
topology: tpu7x:2x2x1
jax: 0.10.0
libtpu: 0.0.40
codegen_flags: <defaults>
</compile_context>

<pallas_src>
import jax
import jax.numpy as jnp
from jax.experimental import pallas as pl
from jax.experimental.pallas import tpu as pltpu


def _memorybank_fwd_kernel(bank_ref, idx_ref, pos_ref, neg_ref):
    # bank_ref: VMEM f32 (A*K, D)   -- flattened prototype bank
    # idx_ref:  VMEM i32 (B*K, 1)   -- flat bank-row index per output row:
    #                                  rows [0, B)      -> positives
    #                                  rows [B, B*K)    -> negatives
    # pos_ref:  VMEM f32 (B, D)
    # neg_ref:  VMEM f32 (B*(K-1), D)
    bank = bank_ref[...]                                   # (A*K, D)
    n_rows = bank.shape[0]
    n_out = idx_ref.shape[0]                               # B*K
    b = pos_ref.shape[0]                                   # B

    # One-hot row selectors for ALL outputs at once: a single lane-iota
    # comparison against the flat gather indices (no per-sample iota
    # re-materialization, no second selector build).
    col = jax.lax.broadcasted_iota(jnp.int32, (n_out, n_rows), 1)
    sel = (col == idx_ref[...]).astype(bank.dtype)         # (B*K, A*K) 0/1

    # Single MXU matmul gathers every positive and negative prototype row.
    gathered = jnp.dot(sel, bank, preferred_element_type=jnp.float32)  # (B*K, D)

    # Dense slab stores (static split of the matmul result).
    pos_ref[...] = gathered[:b].astype(pos_ref.dtype)
    neg_ref[...] = gathered[b:].astype(neg_ref.dtype)


@jax.jit
def memorybank_forward(proto_bank, batch_attributes, batch_values):
    """
    proto_bank:        float32 [A, K, D]   (full prototype bank)
    batch_attributes:  int32   [B]
    batch_values:      int32   [B]
    returns: (positive [B, D], negative [B, K-1, D])
    """
    A, K, D = proto_bank.shape
    B = batch_attributes.shape[0]
    if K < 2:
        raise ValueError("MemoryBank.forward needs K >= 2 values per attribute "
                         "to form negative prototypes.")

    # Clamp indices so out-of-range inputs cannot silently select garbage
    # (valid inputs are unaffected). Pure int index plumbing, O(B*K) elements.
    attr = jnp.clip(batch_attributes.astype(jnp.int32), 0, A - 1)
    val = jnp.clip(batch_values.astype(jnp.int32), 0, K - 1)

    # Flat row index of the positive prototype per sample.
    pos_idx = attr * K + val                                         # (B,)

    # Flat row indices of the negatives: output slot j takes source value
    # j + (j >= val_b), i.e. values 0..K-1 skipping val_b.
    j = jnp.arange(K - 1, dtype=jnp.int32)[None, :]                  # (1, K-1)
    src = j + (j >= val[:, None]).astype(jnp.int32)                  # (B, K-1)
    neg_idx = (attr[:, None] * K + src).reshape(B * (K - 1))         # (B*(K-1),)

    # Combined index vector: first B rows positives, then B*(K-1) negatives.
    idx_all = jnp.concatenate([pos_idx, neg_idx]).reshape(B * K, 1)

    bank_flat = proto_bank.reshape(A * K, D)

    pos, neg_flat = pl.pallas_call(
        _memorybank_fwd_kernel,
        out_shape=(
            jax.ShapeDtypeStruct((B, D), proto_bank.dtype),
            jax.ShapeDtypeStruct((B * (K - 1), D), proto_bank.dtype),
        ),
        in_specs=[
            pl.BlockSpec(memory_space=pltpu.MemorySpace.VMEM),  # bank (whole)
            pl.BlockSpec(memory_space=pltpu.MemorySpace.VMEM),  # combined idx
        ],
        out_specs=(
            pl.BlockSpec(memory_space=pltpu.MemorySpace.VMEM),
            pl.BlockSpec(memory_space=pltpu.MemorySpace.VMEM),
        ),
    )(bank_flat, idx_all)

    return pos, neg_flat.reshape(B, K - 1, D)


def memorybank_forward_ref(proto_bank, batch_attributes, batch_values):
    """Pure-JAX reference matching the PyTorch forward semantics (eager only)."""
    A, K, D = proto_bank.shape
    pos = proto_bank[batch_attributes, batch_values]                 # (B, D)
    negs = []
    for b in range(batch_attributes.shape[0]):
        a = int(batch_attributes[b])
        v = int(batch_values[b])
        rows = [proto_bank[a, k] for k in range(K) if k != v]
        negs.append(jnp.stack(rows))                                 # (K-1, D)
    return pos, jnp.stack(negs)


if __name__ == "__main__":
    # cfg-implied sizes (small, synthetic):
    num_attributes = 4      # cfg.DATA.NUM_ATTRIBUTES
    num_values = 6          # values per attribute (fixed K) -> proto_bank_size = 24
    embed_dim = 32          # cfg.MODEL.EMBED_SIZE
    batch = 8

    key = jax.random.PRNGKey(0)
    k_bank, k_attr, k_val = jax.random.split(key, 3)

    # Deterministic, "full" prototype bank (as if update_prototype_bank ran).
    proto_bank = jax.random.normal(
        k_bank, (num_attributes, num_values, embed_dim), dtype=jnp.float32)
    batch_attributes = jax.random.randint(
        k_attr, (batch,), 0, num_attributes, dtype=jnp.int32)
    batch_values = jax.random.randint(
        k_val, (batch,), 0, num_values, dtype=jnp.int32)

    pos, neg = memorybank_forward(proto_bank, batch_attributes, batch_values)
    jax.block_until_ready((pos, neg))

    pos_ref, neg_ref = memorybank_forward_ref(
        proto_bank, batch_attributes, batch_values)

    assert pos.shape == (batch, embed_dim)
    assert neg.shape == (batch, num_values - 1, embed_dim)
    assert jnp.allclose(pos, pos_ref, atol=1e-5), "positive prototypes mismatch"
    assert jnp.allclose(neg, neg_ref, atol=1e-5), "negative prototypes mismatch"

    # TODO(synk): update_representation_bank / update_prototype_bank /
    # assign_prototype_feature / assign_values are host-side python deque/dict
    # bookkeeping (data-dependent queue mutation); only forward() is expressed
    # as a TPU kernel, assuming a dense bank with a fixed K per attribute.
    print("KERNEL_OK")
</pallas_src>

<mosaic_0001>
module attributes {stable_mosaic.version = 11 : i64} {
  func.func @_memorybank_fwd_kernel(%arg0: memref<24x32xf32, #tpu.memory_space<vmem>>, %arg1: memref<48x1xi32, #tpu.memory_space<vmem>>, %arg2: memref<8x32xf32, #tpu.memory_space<vmem>>, %arg3: memref<40x32xf32, #tpu.memory_space<vmem>>) attributes {dimension_semantics = [], scalar_prefetch = 0 : i64, scratch_operands = 0 : i64, tpu.core_type = #tpu.core_type<tc>} {
    %c0 = arith.constant 0 : index
    %c0_0 = arith.constant 0 : index
    %0 = vector.load %arg0[%c0, %c0_0] : memref<24x32xf32, #tpu.memory_space<vmem>>, vector<24x32xf32>
    %1 = tpu.iota {dimensions = array<i32: 1>} : vector<48x24xi32>
    %c0_1 = arith.constant 0 : index
    %c0_2 = arith.constant 0 : index
    %2 = vector.load %arg1[%c0_1, %c0_2] : memref<48x1xi32, #tpu.memory_space<vmem>>, vector<48x1xi32>
    %3 = vector.broadcast %2 : vector<48x1xi32> to vector<48x24xi32>
    %4 = arith.cmpi eq, %1, %3 : vector<48x24xi32>
    %5 = arith.extui %4 : vector<48x24xi1> to vector<48x24xi32>
    %6 = arith.sitofp %5 : vector<48x24xi32> to vector<48x24xf32>
    %cst = arith.constant dense<0.000000e+00> : vector<48x32xf32>
    %7 = tpu.matmul %6, %0, %cst {dimension_numbers = #tpu.dot_dimension_numbers<[1], [0], [0], [1], [0, 0, 1, 1], [], []>} : vector<48x24xf32>, vector<24x32xf32>, vector<48x32xf32> -> vector<48x32xf32>
    %8 = vector.extract_strided_slice %7 {offsets = [0, 0], sizes = [8, 32], strides = [1, 1]} : vector<48x32xf32> to vector<8x32xf32>
    %c0_3 = arith.constant 0 : index
    %c0_4 = arith.constant 0 : index
    %9 = vector.load %arg2[%c0_3, %c0_4] : memref<8x32xf32, #tpu.memory_space<vmem>>, vector<8x32xf32>
    tpu.vector_store %arg2[%c0_3, %c0_4], %8 {strides = array<i32>} : memref<8x32xf32, #tpu.memory_space<vmem>>, vector<8x32xf32>,
    %10 = vector.extract_strided_slice %7 {offsets = [8, 0], sizes = [40, 32], strides = [1, 1]} : vector<48x32xf32> to vector<40x32xf32>
    %c0_5 = arith.constant 0 : index
    %c0_6 = arith.constant 0 : index
    %11 = vector.load %arg3[%c0_5, %c0_6] : memref<40x32xf32, #tpu.memory_space<vmem>>, vector<40x32xf32>
    tpu.vector_store %arg3[%c0_5, %c0_6], %10 {strides = array<i32>} : memref<40x32xf32, #tpu.memory_space<vmem>>, vector<40x32xf32>,
    return
  }
}

</mosaic_0001>

<llo_original>
// kernel: memorybank_forward.1
$region0: #{memorybank_forward.1}
  #allocation0 [shape = 'u32[]', space=smem, size = 0x4, offset = 0x4, fixed_abs, tag = 'smem constant byte address 0x4 - core index']
  #allocation1 [shape = 'u32[144,128]{1,0:T(1,128)}', space=vmem, size = 0x12000, scoped, tag = 'internal scratch']
  %s0 = inlined_call_operand.vmem [shape: f32[24,32], index: 0, kind: input, shape index: {}]
  %s1 = inlined_call_operand.vmem [shape: s32[48,1], index: 1, kind: input, shape index: {}]
  %s2 = inlined_call_operand.hbm [shape: f32[8,32], index: 2, kind: output, shape index: {0}]
  %s3 = inlined_call_operand.vmem [shape: f32[40,32], index: 3, kind: output, shape index: {1}]
  %4 = xla_tuple %s2, %s3
  %s5 = sld [smem:[#allocation0]]
  $region26: #{memorybank_forward.1} parent=0
    _
  %s7 = ssub.s32 1, %s5
  %s8 = scalar_select 0, %s7, %s5
  $region1: #{memorybank_forward.1} parent=0
    #allocation2 [shape = 'u8[4096]{0}', space=vmem, size = 0x1000, scoped, tag = 'output window, operand 0, single buffered']
    #allocation3 [shape = 's32[1]{0}', space=sflag, size = 0x4, scoped, tag = 'scoped memory for memorybank_forward.1']
    %9 = vsyncpa [#allocation3], 0
    // Predicated region
    $region2: #{memorybank_forward.1} parent=1 // pred_check
      _
    $region3: #{memorybank_forward.1} parent=1 // pred_check_branch
      %11 = sbr.rel (0) target = $region5
    $region4: #{memorybank_forward.1} parent=1 // pred_region
      _
    $region5: #{memorybank_forward.1} parent=1 // pred_fallthru
      _
    // Predicated region
    $region6: #{memorybank_forward.1} parent=1 // pred_check
      _
    $region7: #{memorybank_forward.1} parent=1 // pred_check_branch
      %13 = sbr.rel (0) target = $region9
    $region8: #{memorybank_forward.1} parent=1 // pred_region
      _
    $region9: #{memorybank_forward.1} parent=1 // pred_fallthru
      _
    %v14 = vld [vmem:[%s0] sm:$0xff]
    %v15 = vld [vmem:[%s0 + $0x8] sm:$0xff]
    %v16 = vld [vmem:[%s0 + $0x10] sm:$0xff]
    %v17 = vlaneseq
    %v18 = vand.u32 %v17, 127
    %v19 = vld [vmem:[%s1] sm:$0xff]
    %v20 = vld [vmem:[%s1 + $0x8] sm:$0xff]
    %v21 = vld [vmem:[%s1 + $0x10] sm:$0xff]
    %v22 = vld [vmem:[%s1 + $0x18] sm:$0xff]
    %v23 = vld [vmem:[%s1 + $0x20] sm:$0xff]
    %v24 = vld [vmem:[%s1 + $0x28] sm:$0xff]
    %25 = vset.pattern.permute.xlu0 0
    %26 = vperm.xlu0 %25, %v19
    %v27 = vpop.permute.xlu0 %26
    %28 = vset.pattern.permute.xlu0 0
    %29 = vperm.xlu0 %28, %v20
    %v30 = vpop.permute.xlu0 %29
    %31 = vset.pattern.permute.xlu0 0
    %32 = vperm.xlu0 %31, %v21
    %v33 = vpop.permute.xlu0 %32
    %34 = vset.pattern.permute.xlu0 0
    %35 = vperm.xlu0 %34, %v22
    %v36 = vpop.permute.xlu0 %35
    %37 = vset.pattern.permute.xlu0 0
    %38 = vperm.xlu0 %37, %v23
    %v39 = vpop.permute.xlu0 %38
    %40 = vset.pattern.permute.xlu0 0
    %41 = vperm.xlu0 %40, %v24
    %v42 = vpop.permute.xlu0 %41
    %vm43 = vcmp.eq.s32.totalorder %v18, %v27
    %vm44 = vcmp.eq.s32.totalorder %v18, %v30
    %vm45 = vcmp.eq.s32.totalorder %v18, %v33
    %vm46 = vcmp.eq.s32.totalorder %v18, %v36
    %vm47 = vcmp.eq.s32.totalorder %v18, %v39
    %vm48 = vcmp.eq.s32.totalorder %v18, %v42
    %v49 = vsel %vm43, 1, 0
    %v50 = vsel %vm44, 1, 0
    %v51 = vsel %vm45, 1, 0
    %v52 = vsel %vm46, 1, 0
    %v53 = vsel %vm47, 1, 0
    %v54 = vsel %vm48, 1, 0
    %v55 = vcvt.s32.f32 %v49
    %v56 = vcvt.s32.f32 %v50
    %v57 = vcvt.s32.f32 %v51
    %v58 = vcvt.s32.f32 %v52
    %v59 = vcvt.s32.f32 %v53
    %v60 = vcvt.s32.f32 %v54
    %vm61 = vcmask 195584
    %v63 = vsel %vm61, %v55, 0
    %v66 = vsel %vm61, %v56, 0
    %v69 = vsel %vm61, %v57, 0
    %v72 = vsel %vm61, %v58, 0
    %v75 = vsel %vm61, %v59, 0
    %v78 = vsel %vm61, %v60, 0
    %80 = vmatprep.subr.mxu0 0.0
    %81 = vmatpush1.msra.mxu0 %v14
    %82 = vmatprep.subr.mxu0 0.0
    %83 = vmatpush1.msra.mxu0 %v15
    %84 = vmatprep.subr.mxu0 0.0
    %85 = vmatpush1.msra.mxu0 %v16
    %86 = vmatprep.subr.mxu0 0.0
    %87 = vmatpush1.msra.mxu0 0.0
    %88 = vmatprep.subr.mxu0 0.0
    %89 = vmatpush1.msra.mxu0 0.0
    %90 = vmatprep.subr.mxu0 0.0
    %91 = vmatpush1.msra.mxu0 0.0
    %92 = vmatprep.subr.mxu0 0.0
    %93 = vmatpush1.msra.mxu0 0.0
    %94 = vmatprep.subr.mxu0 0.0
    %95 = vmatpush1.msra.mxu0 0.0
    %96 = vmatprep.subr.mxu0 0.0
    %97 = vmatpush1.msra.mxu0 0.0
    %98 = vmatprep.subr.mxu0 0.0
    %99 = vmatpush1.msra.mxu0 0.0
    %100 = vmatprep.subr.mxu0 0.0
    %101 = vmatpush1.msra.mxu0 0.0
    %102 = vmatprep.subr.mxu0 0.0
    %103 = vmatpush1.msra.mxu0 0.0
    %104 = vmatprep.subr.mxu0 0.0
    %105 = vmatpush1.msra.mxu0 0.0
    %106 = vmatprep.subr.mxu0 0.0
    %107 = vmatpush1.msra.mxu0 0.0
    %108 = vmatprep.subr.mxu0 0.0
    %109 = vmatpush1.msra.mxu0 0.0
    %110 = vmatprep.subr.mxu0 0.0
    %111 = vmatpush1.msra.mxu0 0.0
    %112 = vmatprep.subr.mxu0 0.0
    %113 = vmatpush1.msra.mxu0 0.0
    %114 = vmatprep.subr.mxu0 0.0
    %115 = vmatpush1.msra.mxu0 0.0
    %116 = vmatprep.subr.mxu0 0.0
    %117 = vmatpush1.msra.mxu0 0.0
    %118 = vmatprep.subr.mxu0 0.0
    %119 = vmatpush1.msra.mxu0 0.0
    %120 = vmatprep.subr.mxu0 0.0
    %121 = vmatpush1.msra.mxu0 0.0
    %122 = vmatprep.subr.mxu0 0.0
    %123 = vmatpush1.msra.mxu0 0.0
    %124 = vmatprep.subr.mxu0 0.0
    %125 = vmatpush1.msra.mxu0 0.0
    %126 = vmatprep.subr.mxu0 0.0
    %127 = vmatpush1.msra.mxu0 0.0
    %128 = vmatprep.subr.mxu0 0.0
    %129 = vmatpush1.msra.mxu0 0.0
    %130 = vmatprep.subr.mxu0 0.0
    %131 = vmatpush1.msra.mxu0 0.0
    %132 = vmatprep.subr.mxu0 0.0
    %133 = vmatpush1.msra.mxu0 0.0
    %134 = vmatprep.subr.mxu0 0.0
    %135 = vmatpush1.msra.mxu0 0.0
    %136 = vmatprep.subr.mxu0 0.0
    %137 = vmatpush1.msra.mxu0 0.0
    %138 = vmatprep.subr.mxu0 0.0
    %139 = vmatpush1.msra.mxu0 0.0
    %140 = vmatprep.subr.mxu0 0.0
    %141 = vmatpush1.msra.mxu0 0.0
    %142 = vmatprep.subr.mxu0 0.0
    %143 = vmatpush1.msra.mxu0 0.0
    %144 = vmatprep.mubr.f32.mxu0 0.0
    %145 = vmatmul.mubr.f32.gmra.mrb[0].mxu0 %v63
    %v146 = vpop.f32.mrb[0].mxu0
    %v147 = vadd.f32 0.0, %v146
    %v148 = vpop.f32.mrb[0].mxu0
    %149 = vmatprep.mubr.f32.mxu0 0.0
    %150 = vmatmul.mubr.f32.gmra.mrb[0].mxu0 %v66
    %v151 = vpop.f32.mrb[0].mxu0
    %v152 = vadd.f32 0.0, %v151
    %v153 = vpop.f32.mrb[0].mxu0
    %154 = vmatprep.mubr.f32.mxu0 0.0
    %155 = vmatmul.mubr.f32.gmra.mrb[0].mxu0 %v69
    %v156 = vpop.f32.mrb[0].mxu0
    %v157 = vadd.f32 0.0, %v156
    %v158 = vpop.f32.mrb[0].mxu0
    %159 = vmatprep.mubr.f32.mxu0 0.0
    %160 = vmatmul.mubr.f32.gmra.mrb[0].mxu0 %v72
    %v161 = vpop.f32.mrb[0].mxu0
    %v162 = vadd.f32 0.0, %v161
    %v163 = vpop.f32.mrb[0].mxu0
    %164 = vmatprep.mubr.f32.mxu0 0.0
    %165 = vmatmul.mubr.f32.gmra.mrb[0].mxu0 %v75
    %v166 = vpop.f32.mrb[0].mxu0
    %v167 = vadd.f32 0.0, %v166
    %v168 = vpop.f32.mrb[0].mxu0
    %169 = vmatprep.mubr.f32.mxu0 0.0
    %170 = vmatmul.mubr.f32.gmra.mrb[0].mxu0 %v78
    %v171 = vpop.f32.mrb[0].mxu0
    %v172 = vadd.f32 0.0, %v171
    %v173 = vpop.f32.mrb[0].mxu0
    %174 = vdwg.mxu0
    %vm175 = vcmask 261120
    %176 = vst.msk [vmem:[#allocation2] sm:$0xff] %vm175, %v147
    %177 = vst.msk [vmem:[%s3] sm:$0xff] %vm175, %v152
    %178 = vst.msk [vmem:[%s3 + $0x8] sm:$0xff] %vm175, %v157
    %179 = vst.msk [vmem:[%s3 + $0x10] sm:$0xff] %vm175, %v162
    %180 = vst.msk [vmem:[%s3 + $0x18] sm:$0xff] %vm175, %v167
    %181 = vst.msk [vmem:[%s3 + $0x20] sm:$0xff] %vm175, %v172
    // Predicated region
    $region10: #{memorybank_forward.1} parent=1 // pred_check
      _
    $region11: #{memorybank_forward.1} parent=1 // pred_check_branch
      %183 = sbr.rel (0) target = $region13
    $region12: #{memorybank_forward.1} parent=1 // pred_region
      %s185 = ssub.s32 128, 128
      %186 = vsyncadd [#allocation3], %s185
      %s188 = sshll.u32 [#allocation2], 4
      %s189 = int_to_ptr.vmem [resolvable:$true] %s188
      %191 = dma.vmem_to_hbm [thread:$0]  %s189, 128, %s2, [#allocation3]
    $region13: #{memorybank_forward.1} parent=1 // pred_fallthru
      _
    // Predicated region
    $region14: #{memorybank_forward.1} parent=1 // pred_check
      _
    $region15: #{memorybank_forward.1} parent=1 // pred_check_branch
      %193 = sbr.rel (0) target = $region17
    $region16: #{memorybank_forward.1} parent=1 // pred_region
      _
    $region17: #{memorybank_forward.1} parent=1 // pred_fallthru
      _
    // Predicated region
    $region18: #{memorybank_forward.1} parent=1 // pred_check
      _
    $region19: #{memorybank_forward.1} parent=1 // pred_check_branch
      %195 = sbr.rel (0) target = $region21
    $region20: #{memorybank_forward.1} parent=1 // pred_region
      %196 = dma.done [#allocation3], 128
    $region21: #{memorybank_forward.1} parent=1 // pred_fallthru
      _
    // Predicated region
    $region22: #{memorybank_forward.1} parent=1 // pred_check
      _
    $region23: #{memorybank_forward.1} parent=1 // pred_check_branch
      %198 = sbr.rel (0) target = $region25
    $region24: #{memorybank_forward.1} parent=1 // pred_region
      _
    $region25: #{memorybank_forward.1} parent=1 // pred_fallthru
      _
    %199 = vsyncpa [#allocation3], 1

</llo_original>
